<compile_context>
chip_gen: v6e
topology: v6e:2x2x1
jax: 0.10.0
libtpu: 0.0.40
codegen_flags: <defaults>
</compile_context>

<pallas_src>
import functools

import jax
import jax.numpy as jnp
from jax.experimental import pallas as pl
from jax.experimental.pallas import tpu as pltpu

EPS = 1e-6


def _round_up(n, m):
    return ((n + m - 1) // m) * m


def _residual_kernel(alpha_ref, beta_ref, x_ref, w_ref, b_ref, o_ref, n_ref, *,
                     hidden, col_tile):
    # x_ref: (TR, D) row tile, w_ref: (D, TN), b_ref: (1, TN), o_ref: (TR, TN)
    # n_ref: (TR, D) VMEM scratch holding the normalized tile in the MXU dtype.
    j = pl.program_id(1)

    # Compute the custom LayerNormalization once per row tile (first column step),
    # cache in scratch; the column axis is "arbitrary" so this carry is safe.
    @pl.when(j == 0)
    def _():
        x = x_ref[...].astype(jnp.float32)  # norm math in f32 (v5e VPU has no bf16)
        mean = jnp.mean(x, axis=-1, keepdims=True)
        diff = x - mean
        # unbiased std (N-1), eps added to std (torch.std semantics); two-pass
        # form kept on purpose (better conditioned than E[x^2]-mean^2).
        var = jnp.sum(diff * diff, axis=-1, keepdims=True) * (1.0 / (hidden - 1))
        std = jnp.sqrt(var)
        denom = std + EPS
        # Reciprocal on the EUP slot; one Newton step on the tiny (TR,1) tensor
        # keeps numerics essentially exact while avoiding a full-tile VPU divide.
        inv = pl.reciprocal(denom, approx=True)
        inv = inv * (2.0 - denom * inv)
        scale = alpha_ref[0] * inv                   # fold alpha into per-row scale
        n_ref[...] = (diff * scale + beta_ref[0]).astype(n_ref.dtype)

    # sub_layer = Linear(D, D): MXU matmul in the weight's native dtype
    # (bf16 or f32), f32 accumulation.
    y = jnp.dot(n_ref[...], w_ref[...], preferred_element_type=jnp.float32)
    y = y + b_ref[...].astype(jnp.float32)

    # dropout: eval mode == identity.
    # TODO(synk): training-mode dropout (random masking / 1/(1-p) scaling) not implemented.

    # Residual add: slice the resident x row tile to the current output column tile.
    if col_tile == hidden:
        x_res = x_ref[...].astype(jnp.float32)
    else:
        col0 = j * col_tile
        if col_tile % 128 == 0:
            col0 = pl.multiple_of(col0, 128)
        x_res = x_ref[:, pl.ds(col0, col_tile)].astype(jnp.float32)

    o_ref[...] = (x_res + y).astype(o_ref.dtype)


def residual_conn(x, w, b, alpha, beta, *, row_tile=256, col_tile=None):
    """x: (B, S, D); w: (D, D); b: (D,); alpha/beta: (1,) scalar norm params."""
    B, S, D = x.shape
    rows = B * S

    # Row tiling: big tiles for HBM/MXU efficiency, but split into >=2 grid steps
    # when possible so the parallel row axis can shard across v7x's two TensorCores.
    tile_r = min(row_tile, max(8, _round_up(pl.cdiv(rows, 2), 8)))
    padded_rows = _round_up(rows, tile_r)

    # Column tiling of the weight / output: keep W fully resident when small,
    # otherwise bound the per-buffer footprint (v7x has only 64 MiB VMEM).
    if col_tile is None:
        col_tile = D
        w_bytes = D * D * jnp.dtype(w.dtype).itemsize
        if w_bytes > 12 * 1024 * 1024 and D % 128 == 0:
            for cand in (2048, 1024, 512, 256, 128):
                if cand < D and D % cand == 0:
                    col_tile = cand
                    break
    assert D % col_tile == 0
    n_col = D // col_tile

    x2 = x.reshape(rows, D)
    if padded_rows != rows:
        x2 = jnp.pad(x2, ((0, padded_rows - rows), (0, 0)))
    b2 = b.reshape(1, D)

    kernel = functools.partial(_residual_kernel, hidden=D, col_tile=col_tile)

    out = pl.pallas_call(
        kernel,
        out_shape=jax.ShapeDtypeStruct((padded_rows, D), x.dtype),
        grid_spec=pltpu.PrefetchScalarGridSpec(
            num_scalar_prefetch=0,
            grid=(padded_rows // tile_r, n_col),
            in_specs=[
                # scalar norm params in SMEM
                pl.BlockSpec(memory_space=pltpu.MemorySpace.SMEM),
                pl.BlockSpec(memory_space=pltpu.MemorySpace.SMEM),
                # row tile of x (full hidden; block index constant across the
                # inner column axis -> pipeline elides redundant re-fetches)
                pl.BlockSpec((tile_r, D), lambda i, j: (i, 0)),
                # weight column tile, native dtype
                pl.BlockSpec((D, col_tile), lambda i, j: (0, j)),
                # bias column tile
                pl.BlockSpec((1, col_tile), lambda i, j: (0, j)),
            ],
            out_specs=pl.BlockSpec((tile_r, col_tile), lambda i, j: (i, j)),
            scratch_shapes=[pltpu.VMEM((tile_r, D), w.dtype)],
        ),
        compiler_params=pltpu.CompilerParams(
            # column axis "arbitrary": required for the scratch-carried normed
            # tile; row axis "parallel" for megacore sharding.
            dimension_semantics=("parallel", "arbitrary"),
            vmem_limit_bytes=32 * 1024 * 1024,
        ),
    )(alpha, beta, x2, w, b2)

    if padded_rows != rows:
        out = out[:rows]
    return out.reshape(B, S, D)


def _reference(x, w, b, alpha, beta):
    mean = jnp.mean(x, axis=-1, keepdims=True)
    diff = x - mean
    var = jnp.sum(diff * diff, axis=-1, keepdims=True) / (x.shape[-1] - 1)
    std = jnp.sqrt(var)
    normed = alpha[0] * diff / (std + EPS) + beta[0]
    y = normed @ w + b
    return x + y


if __name__ == "__main__":
    key = jax.random.PRNGKey(0)

    # --- primary small config: B=2, S=8, D=128 ---
    B, S, D = 2, 8, 128
    kx, kw, kb, kx2, kw2, kb2 = jax.random.split(key, 6)

    x = jax.random.normal(kx, (B, S, D), dtype=jnp.float32)
    # deterministic "sub_layer" Linear(D, D) params
    w = (jax.random.normal(kw, (D, D), dtype=jnp.float32) / jnp.sqrt(D)).astype(jnp.float32)
    b = jax.random.normal(kb, (D,), dtype=jnp.float32) * 0.1
    # LayerNormalization params: alpha=ones(1), bias=zeros(1)
    alpha = jnp.ones((1,), dtype=jnp.float32)
    beta = jnp.zeros((1,), dtype=jnp.float32)

    ref = _reference(x, w, b, alpha, beta)

    # f32 storage path
    out = jax.block_until_ready(residual_conn(x, w, b, alpha, beta))
    assert out.shape == (B, S, D)
    assert jnp.allclose(out, ref, atol=1e-3, rtol=1e-3), "mismatch vs reference (f32)"

    # bf16 storage path (v6e/v7x bandwidth + MXU win); norm math stays f32 in-kernel.
    out_bf16 = jax.block_until_ready(
        residual_conn(x.astype(jnp.bfloat16), w.astype(jnp.bfloat16), b, alpha, beta))
    assert out_bf16.shape == (B, S, D)
    assert jnp.allclose(out_bf16.astype(jnp.float32), ref, atol=6e-2, rtol=6e-2), \
        "mismatch vs reference (bf16 storage)"

    # --- column-tiled path (exercises the scratch-cached norm): D=256, col_tile=128 ---
    D2 = 256
    x2 = jax.random.normal(kx2, (B, S, D2), dtype=jnp.float32)
    w2 = (jax.random.normal(kw2, (D2, D2), dtype=jnp.float32) / jnp.sqrt(D2)).astype(jnp.float32)
    b2 = jax.random.normal(kb2, (D2,), dtype=jnp.float32) * 0.1
    ref2 = _reference(x2, w2, b2, alpha, beta)
    out2 = jax.block_until_ready(
        residual_conn(x2, w2, b2, alpha, beta, col_tile=128))
    assert out2.shape == (B, S, D2)
    assert jnp.allclose(out2, ref2, atol=1e-3, rtol=1e-3), "mismatch vs reference (col-tiled)"

    print("KERNEL_OK")
</pallas_src>

<mosaic_0001>
module attributes {stable_mosaic.version = 11 : i64} {
  func.func @_residual_kernel(%arg0: i32, %arg1: i32, %arg2: memref<1xf32, #tpu.memory_space<smem>>, %arg3: memref<1xf32, #tpu.memory_space<smem>>, %arg4: memref<8x128xf32, #tpu.memory_space<vmem>>, %arg5: memref<128x128xf32, #tpu.memory_space<vmem>>, %arg6: memref<1x128xf32, #tpu.memory_space<vmem>>, %arg7: memref<8x128xf32, #tpu.memory_space<vmem>>, %arg8: memref<8x128xf32, #tpu.memory_space<vmem>>) attributes {dimension_semantics = [#tpu.dimension_semantics<parallel>, #tpu.dimension_semantics<arbitrary>], iteration_bounds = array<i64: 2, 1>, scalar_prefetch = 0 : i64, scratch_operands = 1 : i64, tpu.core_type = #tpu.core_type<tc>, window_params = [{transform_indices = @transform_0, window_bounds = array<i64: 1>}, {transform_indices = @transform_1, window_bounds = array<i64: 1>}, {transform_indices = @transform_2, window_bounds = array<i64: 8, 128>}, {transform_indices = @transform_3, window_bounds = array<i64: 128, 128>}, {transform_indices = @transform_4, window_bounds = array<i64: 1, 128>}, {transform_indices = @transform_5, window_bounds = array<i64: 8, 128>}]} {
    %c0_i32 = arith.constant 0 : i32
    %0 = arith.cmpi eq, %arg1, %c0_i32 : i32
    %1 = arith.extui %0 : i1 to i32
    %c0_i32_0 = arith.constant 0 : i32
    %2 = arith.cmpi ne, %1, %c0_i32_0 : i32
    scf.if %2 {
      %c0_10 = arith.constant 0 : index
      %c0_11 = arith.constant 0 : index
      %12 = vector.load %arg4[%c0_10, %c0_11] : memref<8x128xf32, #tpu.memory_space<vmem>>, vector<8x128xf32>
      %cst_12 = arith.constant dense<0.000000e+00> : vector<8xf32>
      %13 = vector.multi_reduction <add>, %12, %cst_12 [1] : vector<8x128xf32> to vector<8xf32>
      %14 = vector.shape_cast %13 : vector<8xf32> to vector<8x1xf32>
      %cst_13 = arith.constant 1.280000e+02 : f32
      %15 = vector.broadcast %cst_13 : f32 to vector<8x1xf32>
      %16 = arith.divf %14, %15 : vector<8x1xf32>
      %17 = vector.broadcast %16 : vector<8x1xf32> to vector<8x128xf32>
      %18 = arith.subf %12, %17 : vector<8x128xf32>
      %19 = arith.mulf %18, %18 : vector<8x128xf32>
      %cst_14 = arith.constant dense<0.000000e+00> : vector<8xf32>
      %20 = vector.multi_reduction <add>, %19, %cst_14 [1] : vector<8x128xf32> to vector<8xf32>
      %21 = vector.shape_cast %20 : vector<8xf32> to vector<8x1xf32>
      %cst_15 = arith.constant 0.00787401571 : f32
      %22 = vector.broadcast %cst_15 : f32 to vector<8x1xf32>
      %23 = arith.mulf %21, %22 : vector<8x1xf32>
      %24 = math.sqrt %23 : vector<8x1xf32>
      %cst_16 = arith.constant 9.99999997E-7 : f32
      %25 = vector.broadcast %cst_16 : f32 to vector<8x1xf32>
      %26 = arith.addf %24, %25 : vector<8x1xf32>
      %27 = tpu.reciprocal %26 {approx = true} : vector<8x1xf32> -> vector<8x1xf32>
      %28 = arith.mulf %26, %27 : vector<8x1xf32>
      %cst_17 = arith.constant 2.000000e+00 : f32
      %29 = vector.broadcast %cst_17 : f32 to vector<8x1xf32>
      %30 = arith.subf %29, %28 : vector<8x1xf32>
      %31 = arith.mulf %27, %30 : vector<8x1xf32>
      %c0_18 = arith.constant 0 : index
      %32 = memref.load %arg2[%c0_18] : memref<1xf32, #tpu.memory_space<smem>>
      %33 = vector.broadcast %32 : f32 to vector<8x1xf32>
      %34 = arith.mulf %33, %31 : vector<8x1xf32>
      %35 = vector.broadcast %34 : vector<8x1xf32> to vector<8x128xf32>
      %36 = arith.mulf %18, %35 : vector<8x128xf32>
      %c0_19 = arith.constant 0 : index
      %37 = memref.load %arg3[%c0_19] : memref<1xf32, #tpu.memory_space<smem>>
      %38 = vector.broadcast %37 : f32 to vector<8x128xf32>
      %39 = arith.addf %36, %38 : vector<8x128xf32>
      %c0_20 = arith.constant 0 : index
      %c0_21 = arith.constant 0 : index
      %40 = vector.load %arg8[%c0_20, %c0_21] : memref<8x128xf32, #tpu.memory_space<vmem>>, vector<8x128xf32>
      tpu.vector_store %arg8[%c0_20, %c0_21], %39 {strides = array<i32>} : memref<8x128xf32, #tpu.memory_space<vmem>>, vector<8x128xf32>,
    } else {
    }
    %c0 = arith.constant 0 : index
    %c0_1 = arith.constant 0 : index
    %3 = vector.load %arg8[%c0, %c0_1] : memref<8x128xf32, #tpu.memory_space<vmem>>, vector<8x128xf32>
    %c0_2 = arith.constant 0 : index
    %c0_3 = arith.constant 0 : index
    %4 = vector.load %arg5[%c0_2, %c0_3] : memref<128x128xf32, #tpu.memory_space<vmem>>, vector<128x128xf32>
    %cst = arith.constant dense<0.000000e+00> : vector<8x128xf32>
    %5 = tpu.matmul %3, %4, %cst {dimension_numbers = #tpu.dot_dimension_numbers<[1], [0], [0], [1], [0, 0, 1, 1], [], []>} : vector<8x128xf32>, vector<128x128xf32>, vector<8x128xf32> -> vector<8x128xf32>
    %c0_4 = arith.constant 0 : index
    %c0_5 = arith.constant 0 : index
    %6 = vector.load %arg6[%c0_4, %c0_5] : memref<1x128xf32, #tpu.memory_space<vmem>>, vector<1x128xf32>
    %7 = vector.broadcast %6 : vector<1x128xf32> to vector<8x128xf32>
    %8 = arith.addf %5, %7 : vector<8x128xf32>
    %c0_6 = arith.constant 0 : index
    %c0_7 = arith.constant 0 : index
    %9 = vector.load %arg4[%c0_6, %c0_7] : memref<8x128xf32, #tpu.memory_space<vmem>>, vector<8x128xf32>
    %10 = arith.addf %9, %8 : vector<8x128xf32>
    %c0_8 = arith.constant 0 : index
    %c0_9 = arith.constant 0 : index
    %11 = vector.load %arg7[%c0_8, %c0_9] : memref<8x128xf32, #tpu.memory_space<vmem>>, vector<8x128xf32>
    tpu.vector_store %arg7[%c0_8, %c0_9], %10 {strides = array<i32>} : memref<8x128xf32, #tpu.memory_space<vmem>>, vector<8x128xf32>,
    return
  }
  func.func @transform_0(%arg0: i32, %arg1: i32) -> i32 {
    %c0_i32 = arith.constant 0 : i32
    %c0_i32_0 = arith.constant 0 : i32
    return %c0_i32 : i32
  }
  func.func @transform_1(%arg0: i32, %arg1: i32) -> i32 {
    %c0_i32 = arith.constant 0 : i32
    %c0_i32_0 = arith.constant 0 : i32
    return %c0_i32 : i32
  }
  func.func @transform_2(%arg0: i32, %arg1: i32) -> (i32, i32) {
    %c0_i32 = arith.constant 0 : i32
    %c0_i32_0 = arith.constant 0 : i32
    return %arg0, %c0_i32 : i32, i32
  }
  func.func @transform_3(%arg0: i32, %arg1: i32) -> (i32, i32) {
    %c0_i32 = arith.constant 0 : i32
    %c0_i32_0 = arith.constant 0 : i32
    return %c0_i32, %arg1 : i32, i32
  }
  func.func @transform_4(%arg0: i32, %arg1: i32) -> (i32, i32) {
    %c0_i32 = arith.constant 0 : i32
    %c0_i32_0 = arith.constant 0 : i32
    return %c0_i32, %arg1 : i32, i32
  }
  func.func @transform_5(%arg0: i32, %arg1: i32) -> (i32, i32) {
    %c0_i32 = arith.constant 0 : i32
    return %arg0, %arg1 : i32, i32
  }
}

</mosaic_0001>

<llo_original>
// kernel: tpu_custom_call.1
$region0: #{tpu_custom_call.1}
  #allocation0 [shape = 'u32[]', space=smem, size = 0x4, offset = 0x4, fixed_abs, tag = 'smem constant byte address 0x4 - core index']
  #allocation1 [shape = 'u32[144,128]{1,0:T(1,128)}', space=vmem, size = 0x12000, scoped, tag = 'internal scratch']
  #allocation2 [shape = 'f32[8,128]{1,0:T(8,128)}', space=vmem, size = 0x1000, scoped, tag = 'scratch operand']
  #allocation3 [shape = 'f32[1]{0:T(128)S(6)}', space=smem, size = 0x200, scoped, tag = 'scoped memory for tpu_custom_call.1']
  #allocation4 [shape = 'f32[1]{0:T(128)S(6)}', space=smem, size = 0x200, scoped, tag = 'scoped memory for tpu_custom_call.1']
  %s0 = inlined_call_operand.<no memory space> [shape: f32[1], index: 0, kind: input, shape index: {}]
  %s1 = inlined_call_operand.<no memory space> [shape: f32[1], index: 1, kind: input, shape index: {}]
  %s2 = inlined_call_operand.hbm [shape: f32[16,128], index: 2, kind: input, shape index: {}]
  %s3 = inlined_call_operand.hbm [shape: f32[128,128], index: 3, kind: input, shape index: {}]
  %s4 = inlined_call_operand.vmem [shape: f32[1,128], index: 4, kind: input, shape index: {}]
  %s5 = inlined_call_operand.hbm [shape: f32[16,128], index: 5, kind: output, shape index: {}]
  %s6 = sld [smem:[#allocation0]]
  $region65: #{tpu_custom_call.1} parent=0
    _
  %s8 = ssub.s32 1, %s6
  %s9 = scalar_select 0, %s8, %s6
  %10 = sst [smem:[#allocation3]] %s0
  %11 = sst [smem:[#allocation4]] %s1
  $region1: #{tpu_custom_call.1} parent=0
    #allocation5 [shape = 'u8[8192]{0}', space=vmem, size = 0x2000, scoped, tag = 'input window, operand 2']
    #allocation6 [shape = 's32[2]{0}', space=sflag, size = 0x8, scoped, tag = 'scoped memory for tpu_custom_call.1']
    #allocation7 [shape = 's32[2]{0}', space=sflag, size = 0x8, scoped, tag = 'scoped memory for tpu_custom_call.1']
    #allocation8 [shape = 'u8[65536]{0}', space=vmem, size = 0x10000, scoped, tag = 'input window, operand 3, single buffered']
    #allocation9 [shape = 's32[1]{0}', space=sflag, size = 0x4, scoped, tag = 'scoped memory for tpu_custom_call.1']
    #allocation10 [shape = 'u8[8192]{0}', space=vmem, size = 0x2000, scoped, tag = 'output window, operand 0']
    %12 = vsyncpa [#allocation6], 0
    %s13 = scalar_lea.sflag [#allocation6], 1
    %14 = vsyncpa %s13, 0
    %15 = vsyncpa [#allocation9], 0
    %16 = vsyncpa [#allocation7], 0
    %s17 = scalar_lea.sflag [#allocation7], 1
    %18 = vsyncpa %s17, 0
    loop: start=0, step=1, limit=4
    $region2: #{tpu_custom_call.1} parent=1 // loop_pre_header
      _
    $region3: #{tpu_custom_call.1} parent=1 // loop_header
      %s20 = sphi 0, %s24
      %p21 = scmp.ge.s32.totalorder %s20, 4
      %s27 = sphi 0, %s39
      %s28 = sphi 0, %s35
      %s29 = sphi 0, %s27
      %s30 = sphi 0, %s28
      %s31 = sphi 0, %s29
      %s32 = sphi 0, %s30
      %s40 = sphi 0, %s40
      %s42 = sphi 0, %s40
      %s43 = sphi 0, %s42
      %s57 = sphi 0, %s43
      %s61 = sphi 0, %s61
      %s63 = sphi 0, %s61
      %s64 = sphi 0, %s63
      %s78 = sphi 0, %s64
      %s84 = sphi 0, %s86
      %s87 = sphi 0, %s84
      %s88 = sphi 0, %s87
      %s104 = sphi 0, %s88
      %s110 = sphi 0, %s112
      %s113 = sphi 0, %s110
      %s114 = sphi 0, %s113
      %s130 = sphi 0, %s114
      %s136 = sphi 0, %s138
      %s139 = sphi 0, %s136
      %s140 = sphi 0, %s139
      %s156 = sphi 0, %s140
      %s164 = sphi 0, %s166
      %s167 = sphi 0, %s164
      %s168 = sphi 0, %s167
      %s184 = sphi 0, %s168
    $region4: #{tpu_custom_call.1} parent=1 // loop_header_branch
      %23 = sbr.rel (%p21) target = $region8
    $region5: #{tpu_custom_call.1} parent=1 // loop_body
      %s25 = ssub.s32 %s20, 1
      %s26 = ssub.s32 %s20, 2
      %s33 = sadd.s32 1, %s28
      %p34 = scmp.ge.s32.totalorder %s33, 1
      %s35 = scalar_select %p34, 0, %s33
      %s36 = sadd.s32 1, %s27
      %s37 = scalar_select %p34, %s36, %s27
      %p38 = scmp.ge.s32.totalorder %s37, 2
      %s39 = scalar_select %p38, 0, %s37
      %s41 = sadd.s32 %s40, 1
      %p44 = scmp.eq.s32.totalorder %s20, 1
      %p45 = scmp.ne.s32.totalorder %s40, %s42
      %p46 = scmp.eq.s32.totalorder %s20, 0
      %p47 = por %p45, %p46
      %p48 = scmp.ne.s32.totalorder %s40, %s42
      %p49 = scmp.eq.s32.totalorder %s25, 1
      %p50 = por %p48, %p49
      %p51 = scmp.ne.s32.totalorder %s42, %s43
      %p52 = scmp.eq.s32.totalorder %s25, 0
      %p53 = por %p51, %p52
      %p54 = scmp.ne.s32.totalorder %s42, %s43
      %p55 = scmp.eq.s32.totalorder %s26, 1
      %p56 = por %p54, %p55
      %p58 = scmp.ne.s32.totalorder %s43, %s57
      %p59 = scmp.eq.s32.totalorder %s26, 0
      %p60 = por %p58, %p59
      %s62 = sadd.s32 %s61, 1
      %p65 = scmp.eq.s32.totalorder %s20, 1
      %p66 = scmp.ne.s32.totalorder %s61, %s63
      %p67 = scmp.eq.s32.totalorder %s20, 0
      %p68 = por %p66, %p67
      %p69 = scmp.ne.s32.totalorder %s61, %s63
      %p70 = scmp.eq.s32.totalorder %s25, 1
      %p71 = por %p69, %p70
      %p72 = scmp.ne.s32.totalorder %s63, %s64
      %p73 = scmp.eq.s32.totalorder %s25, 0
      %p74 = por %p72, %p73
      %p75 = scmp.ne.s32.totalorder %s63, %s64
      %p76 = scmp.eq.s32.totalorder %s26, 1
      %p77 = por %p75, %p76
      %p79 = scmp.ne.s32.totalorder %s64, %s78
      %p80 = scmp.eq.s32.totalorder %s26, 0
      %p81 = por %p79, %p80
      %s82 = ssub.s32 %s27, %s39
      %p83 = scmp.eq.s32.totalorder %s82, 0
      %s85 = sadd.s32 %s84, 1
      %s86 = scalar_select %p83, %s84, %s85
      %p89 = pneg %p83
      %p90 = scmp.eq.s32.totalorder %s20, 1
      %p91 = por %p89, %p90
      %p92 = scmp.ne.s32.totalorder %s84, %s87
      %p93 = scmp.eq.s32.totalorder %s20, 0
      %p94 = por %p92, %p93
      %p95 = scmp.ne.s32.totalorder %s84, %s87
      %p96 = scmp.eq.s32.totalorder %s25, 1
      %p97 = por %p95, %p96
      %p98 = scmp.ne.s32.totalorder %s87, %s88
      %p99 = scmp.eq.s32.totalorder %s25, 0
      %p100 = por %p98, %p99
      %p101 = scmp.ne.s32.totalorder %s87, %s88
      %p102 = scmp.eq.s32.totalorder %s26, 1
      %p103 = por %p101, %p102
      %p105 = scmp.ne.s32.totalorder %s88, %s104
      %p106 = scmp.eq.s32.totalorder %s26, 0
      %p107 = por %p105, %p106
      %s108 = ssub.s32 %s28, %s35
      %p109 = scmp.eq.s32.totalorder %s108, 0
      %s111 = sadd.s32 %s110, 1
      %s112 = scalar_select %p109, %s110, %s111
      %p115 = pneg %p109
      %p116 = scmp.eq.s32.totalorder %s20, 1
      %p117 = por %p115, %p116
      %p118 = scmp.ne.s32.totalorder %s110, %s113
      %p119 = scmp.eq.s32.totalorder %s20, 0
      %p120 = por %p118, %p119
      %p121 = scmp.ne.s32.totalorder %s110, %s113
      %p122 = scmp.eq.s32.totalorder %s25, 1
      %p123 = por %p121, %p122
      %p124 = scmp.ne.s32.totalorder %s113, %s114
      %p125 = scmp.eq.s32.totalorder %s25, 0
      %p126 = por %p124, %p125
      %p127 = scmp.ne.s32.totalorder %s113, %s114
      %p128 = scmp.eq.s32.totalorder %s26, 1
      %p129 = por %p127, %p128
      %p131 = scmp.ne.s32.totalorder %s114, %s130
      %p132 = scmp.eq.s32.totalorder %s26, 0
      %p133 = por %p131, %p132
      %s134 = ssub.s32 %s28, %s35
      %p135 = scmp.eq.s32.totalorder %s134, 0
      %s137 = sadd.s32 %s136, 1
      %s138 = scalar_select %p135, %s136, %s137
      %p141 = pneg %p135
      %p142 = scmp.eq.s32.totalorder %s20, 1
      %p143 = por %p141, %p142
      %p144 = scmp.ne.s32.totalorder %s136, %s139
      %p145 = scmp.eq.s32.totalorder %s20, 0
      %p146 = por %p144, %p145
      %p147 = scmp.ne.s32.totalorder %s136, %s139
      %p148 = scmp.eq.s32.totalorder %s25, 1
      %p149 = por %p147, %p148
      %p150 = scmp.ne.s32.totalorder %s139, %s140
      %p151 = scmp.eq.s32.totalorder %s25, 0
      %p152 = por %p150, %p151
      %p153 = scmp.ne.s32.totalorder %s139, %s140
      %p154 = scmp.eq.s32.totalorder %s26, 1
      %p155 = por %p153, %p154
      %p157 = scmp.ne.s32.totalorder %s140, %s156
      %p158 = scmp.eq.s32.totalorder %s26, 0
      %p159 = por %p157, %p158
      %s160 = ssub.s32 %s27, %s39
      %s161 = ssub.s32 %s28, %s35
      %s162 = sor.u32 %s160, %s161
      %p163 = scmp.eq.s32.totalorder %s162, 0
      %s165 = sadd.s32 %s164, 1
      %s166 = scalar_select %p163, %s164, %s165
      %p169 = pneg %p163
      %p170 = scmp.eq.s32.totalorder %s20, 1
      %p171 = por %p169, %p170
      %p172 = scmp.ne.s32.totalorder %s164, %s167
      %p173 = scmp.eq.s32.totalorder %s20, 0
      %p174 = por %p172, %p173
      %p175 = scmp.ne.s32.totalorder %s164, %s167
      %p176 = scmp.eq.s32.totalorder %s25, 1
      %p177 = por %p175, %p176
      %p178 = scmp.ne.s32.totalorder %s167, %s168
      %p179 = scmp.eq.s32.totalorder %s25, 0
      %p180 = por %p178, %p179
      %p181 = scmp.ne.s32.totalorder %s167, %s168
      %p182 = scmp.eq.s32.totalorder %s26, 1
      %p183 = por %p181, %p182
      %p185 = scmp.ne.s32.totalorder %s168, %s184
      %p186 = scmp.eq.s32.totalorder %s26, 0
      %p187 = por %p185, %p186
      %p188 = scmp.le.s32.totalorder 1, %s20
      %p189 = scmp.lt.s32.totalorder %s20, 3
      %p190 = pnand %p188, %p189
      %p191 = pneg %p190
      // Predicated region
      $region9: #{tpu_custom_call.1} parent=5 // pred_check
        _
      $region10: #{tpu_custom_call.1} parent=5 // pred_check_branch
        %193 = sbr.rel (%p190) target = $region12
      $region11: #{tpu_custom_call.1} parent=5 // pred_region
        %s194 = ssub.s32 %s20, 1
        // Predicated region
        $region13: #{tpu_custom_call.1} parent=11 // pred_check
          %p195 = pneg %p53
        $region14: #{tpu_custom_call.1} parent=11 // pred_check_branch
          %197 = sbr.rel (%p195) target = $region16
        $region15: #{tpu_custom_call.1} parent=11 // pred_region
          _
        $region16: #{tpu_custom_call.1} parent=11 // pred_fallthru
          _
        // Predicated region
        $region17: #{tpu_custom_call.1} parent=11 // pred_check
          %p198 = pneg %p74
        $region18: #{tpu_custom_call.1} parent=11 // pred_check_branch
          %200 = sbr.rel (%p198) target = $region20
        $region19: #{tpu_custom_call.1} parent=11 // pred_region
          _
        $region20: #{tpu_custom_call.1} parent=11 // pred_fallthru
          _
        // Predicated region
        $region21: #{tpu_custom_call.1} parent=11 // pred_check
          %p201 = pneg %p126
        $region22: #{tpu_custom_call.1} parent=11 // pred_check_branch
          %203 = sbr.rel (%p201) target = $region24
        $region23: #{tpu_custom_call.1} parent=11 // pred_region
          %s205 = ssub.s32 2048, 2048
          %206 = vsyncadd [#allocation9], %s205
          %s207 = smul.addr %s30, 128
          %s208 = scalar_lea.hbm %s3, %s207
          %s209 = sshll.u32 [#allocation8], 4
          %s210 = int_to_ptr.vmem [resolvable:$true] %s209
          %215 = dma.hbm_to_vmem [thread:$0]  %s208, 2048, %s210, [#allocation9], 128, 128, 8
        $region24: #{tpu_custom_call.1} parent=11 // pred_fallthru
          _
        // Predicated region
        $region25: #{tpu_custom_call.1} parent=11 // pred_check
          %p216 = pneg %p152
        $region26: #{tpu_custom_call.1} parent=11 // pred_check_branch
          %218 = sbr.rel (%p216) target = $region28
        $region27: #{tpu_custom_call.1} parent=11 // pred_region
          %p219 = scmp.lt.s32.totalorder %s30, 0
          %s220 = scalar_select %p219, %s30, 0
          %s221 = scalar_lea.vmem %s4, %s220
        $region28: #{tpu_custom_call.1} parent=11 // pred_fallthru
          _
      $region12: #{tpu_custom_call.1} parent=5 // pred_fallthru
        _
      %p222 = scmp.lt.s32.totalorder %s20, 2
      // Predicated region
      $region29: #{tpu_custom_call.1} parent=5 // pred_check
        %p223 = pneg %p222
      $region30: #{tpu_custom_call.1} parent=5 // pred_check_branch
        %225 = sbr.rel (%p223) target = $region32
      $region31: #{tpu_custom_call.1} parent=5 // pred_region
        // Predicated region
        $region33: #{tpu_custom_call.1} parent=31 // pred_check
          %p226 = pneg %p94
        $region34: #{tpu_custom_call.1} parent=31 // pred_check_branch
          %228 = sbr.rel (%p226) target = $region36
        $region35: #{tpu_custom_call.1} parent=31 // pred_region
          %s229 = sand.u32 %s84, 1
          %s230 = scalar_lea.sflag [#allocation6], %s229
          %s231 = sand.u32 %s84, 1
          %s232 = smul.addr %s231, 8
          %s233 = scalar_lea.vmem [#allocation5], %s232
          %s235 = ssub.s32 128, 128
          %236 = vsyncadd %s230, %s235
          %s237 = smul.addr %s27, 128
          %s238 = scalar_lea.hbm %s2, %s237
          %s240 = sshll.u32 %s233, 4
          %s241 = int_to_ptr.vmem [resolvable:$true] %s240
          %243 = dma.hbm_to_vmem [thread:$0]  %s238, 128, %s241, %s230
        $region36: #{tpu_custom_call.1} parent=31 // pred_fallthru
          _
      $region32: #{tpu_custom_call.1} parent=5 // pred_fallthru
        _
      %p244 = scmp.le.s32.totalorder 1, %s20
      %p245 = scmp.lt.s32.totalorder %s20, 3
      %p246 = pnand %p244, %p245
      %p247 = pneg %p246
      // Predicated region
      $region37: #{tpu_custom_call.1} parent=5 // pred_check
        _
      $region38: #{tpu_custom_call.1} parent=5 // pred_check_branch
        %249 = sbr.rel (%p246) target = $region40
      $region39: #{tpu_custom_call.1} parent=5 // pred_region
        %s250 = ssub.s32 %s20, 1
        %s251 = sand.u32 %s87, 1
        %s252 = scalar_lea.sflag [#allocation6], %s251
        %s253 = sand.u32 %s87, 1
        %s254 = smul.addr %s253, 8
        %s255 = scalar_lea.vmem [#allocation5], %s254
        // Predicated region
        $region41: #{tpu_custom_call.1} parent=39 // pred_check
          %p256 = pneg %p100
        $region42: #{tpu_custom_call.1} parent=39 // pred_check_branch
          %258 = sbr.rel (%p256) target = $region44
        $region43: #{tpu_custom_call.1} parent=39 // pred_region
          %259 = dma.done %s252, 128
        $region44: #{tpu_custom_call.1} parent=39 // pred_fallthru
          _
        // Predicated region
        $region45: #{tpu_custom_call.1} parent=39 // pred_check
          %p260 = pneg %p126
        $region46: #{tpu_custom_call.1} parent=39 // pred_check_branch
          %262 = sbr.rel (%p260) target = $region48
        $region47: #{tpu_custom_call.1} parent=39 // pred_region
          %263 = dma.done [#allocation9], 2048
        $region48: #{tpu_custom_call.1} parent=39 // pred_fallthru
          _
        %p264 = pneg %p53
        %p265 = pneg %p50
        %p266 = pneg %p74
        %p267 = pneg %p71
        %s268 = sand.u32 %s87, 1
        %s269 = scalar_lea.sflag [#allocation6], %s268
        %s270 = sand.u32 %s87, 1
        %s271 = smul.addr %s270, 8
        %s272 = scalar_lea.vmem [#allocation5], %s271
        %p273 = pneg %p100
        %p274 = pneg %p97
        %p275 = pneg %p126
        %p276 = pneg %p123
        %p277 = scmp.lt.s32.totalorder %s30, 0
        %s278 = scalar_select %p277, %s30, 0
        %s279 = scalar_lea.vmem %s4, %s278
        %p280 = pneg %p152
        %p281 = pneg %p149
        %p282 = pneg %p180
        %p283 = pneg %p177
        %s284 = sand.u32 %s167, 1
        %s285 = scalar_lea.sflag [#allocation7], %s284
        %s286 = sand.u32 %s167, 1
        %s287 = smul.addr %s286, 8
        %s288 = scalar_lea.vmem [#allocation10], %s287
        %p289 = scmp.lt.s32.totalorder %s30, 0
        %s290 = scalar_select %p289, %s30, 0
        %s291 = scalar_lea.vmem %s4, %s290
        %p292 = scmp.eq.s32.totalorder %s30, 0
        // Predicated region
        $region49: #{tpu_custom_call.1} parent=39 // pred_check
          %p293 = pneg %p292
        $region50: #{tpu_custom_call.1} parent=39 // pred_check_branch
          %295 = sbr.rel (%p293) target = $region52
        $region51: #{tpu_custom_call.1} parent=39 // pred_region
          %v296 = vld [vmem:[%s255] sm:$0xff]
          %297 = vadd.xlane.f32.xlu0 %v296
          %v298 = vpop.xlane.xlu0 %297
          %v299 = vrcp.pop 128.0
          %v300 = vmul.f32 %v298, %v299
          %v301 = vsub.f32 %v296, %v300
          %v302 = vmul.f32 %v301, %v301
          %303 = vadd.xlane.f32.xlu0 %v302
          %v304 = vpop.xlane.xlu0 %303
          %v305 = vmul.f32 %v304, 0.007874016
          %v306 = vrsqrt.pop %v305
          %v307 = vmul.f32 %v305, %v306
          %vm308 = vcmp.eq.f32.partialorder %v305, inf
          %v309 = vsel %vm308, %v305, %v307
          %vm310 = vcmp.eq.f32.partialorder %v305, 0.0
          %v311 = vand.u32 %v305, 2147483648
          %v312 = vsel %vm310, %v311, %v309
          %v313 = vadd.f32 %v312, 1e-06
          %v314 = vrcp.pop %v313
          %v315 = vmul.f32 %v313, %v314
          %v316 = vsub.f32 2.0, %v315
          %v317 = vmul.f32 %v314, %v316
          %s318 = sld [smem:[#allocation3]]
          %v319 = vstv %s318
          %v320 = vmul.f32 %v319, %v317
          %v321 = vmul.f32 %v301, %v320
          %s322 = sld [smem:[#allocation4]]
          %v323 = vstv %s322
          %v324 = vadd.f32 %v321, %v323
          %325 = vst [vmem:[#allocation2] sm:$0xff] %v324
        $region52: #{tpu_custom_call.1} parent=39 // pred_fallthru
          _
        %v326 = vld [vmem:[#allocation2] sm:$0xff]
        %v327 = vld [vmem:[#allocation8] sm:$0xff]
        %v328 = vld [vmem:[#allocation8 + $0x8] sm:$0xff]
        %v329 = vld [vmem:[#allocation8 + $0x10] sm:$0xff]
        %v330 = vld [vmem:[#allocation8 + $0x18] sm:$0xff]
        %v331 = vld [vmem:[#allocation8 + $0x20] sm:$0xff]
        %v332 = vld [vmem:[#allocation8 + $0x28] sm:$0xff]
        %v333 = vld [vmem:[#allocation8 + $0x30] sm:$0xff]
        %v334 = vld [vmem:[#allocation8 + $0x38] sm:$0xff]
        %v335 = vld [vmem:[#allocation8 + $0x40] sm:$0xff]
        %v336 = vld [vmem:[#allocation8 + $0x48] sm:$0xff]
        %v337 = vld [vmem:[#allocation8 + $0x50] sm:$0xff]
        %v338 = vld [vmem:[#allocation8 + $0x58] sm:$0xff]
        %v339 = vld [vmem:[#allocation8 + $0x60] sm:$0xff]
        %v340 = vld [vmem:[#allocation8 + $0x68] sm:$0xff]
        %v341 = vld [vmem:[#allocation8 + $0x70] sm:$0xff]
        %v342 = vld [vmem:[#allocation8 + $0x78] sm:$0xff]
        %v343 = vld [vmem:[%s291] sm:$0x1]
        %v345 = vlaneseq
        %v346 = vshrl.u32 %v345, 7
        %v347 = vsub.s32 0, %v346
        %v348 = vrot.slane %v343, %v347
        %350 = vmatprep.subr.mxu0 0.0
        %351 = vmatpush1.msra.mxu0 %v342
        %352 = vmatprep.subr.mxu0 0.0
        %353 = vmatpush1.msra.mxu0 %v341
        %354 = vmatprep.subr.mxu0 0.0
        %355 = vmatpush1.msra.mxu0 %v340
        %356 = vmatprep.subr.mxu0 0.0
        %357 = vmatpush1.msra.mxu0 %v339
        %358 = vmatprep.subr.mxu0 0.0
        %359 = vmatpush1.msra.mxu0 %v338
        %360 = vmatprep.subr.mxu0 0.0
        %361 = vmatpush1.msra.mxu0 %v337
        %362 = vmatprep.subr.mxu0 0.0
        %363 = vmatpush1.msra.mxu0 %v336
        %364 = vmatprep.subr.mxu0 0.0
        %365 = vmatpush1.msra.mxu0 %v335
        %366 = vmatprep.subr.mxu0 0.0
        %367 = vmatpush1.msra.mxu0 %v334
        %368 = vmatprep.subr.mxu0 0.0
        %369 = vmatpush1.msra.mxu0 %v333
        %370 = vmatprep.subr.mxu0 0.0
        %371 = vmatpush1.msra.mxu0 %v332
        %372 = vmatprep.subr.mxu0 0.0
        %373 = vmatpush1.msra.mxu0 %v331
        %374 = vmatprep.subr.mxu0 0.0
        %375 = vmatpush1.msra.mxu0 %v330
        %376 = vmatprep.subr.mxu0 0.0
        %377 = vmatpush1.msra.mxu0 %v329
        %378 = vmatprep.subr.mxu0 0.0
        %379 = vmatpush1.msra.mxu0 %v328
        %380 = vmatprep.subr.mxu0 0.0
        %381 = vmatpush1.msra.mxu0 %v327
        %382 = vmatprep.subr.mxu0 0.0
        %383 = vmatpush2.msra.mxu0 0.0
        %384 = vmatprep.subr.mxu0 0.0
        %385 = vmatpush2.msra.mxu0 0.0
        %386 = vmatprep.subr.mxu0 0.0
        %387 = vmatpush2.msra.mxu0 0.0
        %388 = vmatprep.subr.mxu0 0.0
        %389 = vmatpush2.msra.mxu0 0.0
        %390 = vmatprep.subr.mxu0 0.0
        %391 = vmatpush2.msra.mxu0 0.0
        %392 = vmatprep.subr.mxu0 0.0
        %393 = vmatpush2.msra.mxu0 0.0
        %394 = vmatprep.subr.mxu0 0.0
        %395 = vmatpush2.msra.mxu0 0.0
        %396 = vmatprep.subr.mxu0 0.0
        %397 = vmatpush2.msra.mxu0 0.0
        %398 = vmatprep.subr.mxu0 0.0
        %399 = vmatpush2.msra.mxu0 0.0
        %400 = vmatprep.subr.mxu0 0.0
        %401 = vmatpush2.msra.mxu0 0.0
        %402 = vmatprep.subr.mxu0 0.0
        %403 = vmatpush2.msra.mxu0 0.0
        %404 = vmatprep.subr.mxu0 0.0
        %405 = vmatpush2.msra.mxu0 0.0
        %406 = vmatprep.subr.mxu0 0.0
        %407 = vmatpush2.msra.mxu0 0.0
        %408 = vmatprep.subr.mxu0 0.0
        %409 = vmatpush2.msra.mxu0 0.0
        %410 = vmatprep.subr.mxu0 0.0
        %411 = vmatpush2.msra.mxu0 0.0
        %412 = vmatprep.subr.mxu0 0.0
        %413 = vmatpush2.msra.mxu0 0.0
        %414 = vmatprep.mubr.f32.mxu0 0.0
        %415 = vmatmul.mubr.f32.gmra.mxu0 %v326
        %v416 = vpop.f32.mrf.mxu0
        %v417 = vadd.f32 %v348, %v416
        %v418 = vpop.f32.mrf.mxu0
        %419 = vdwg.mxu0
        %v420 = vld [vmem:[%s255] sm:$0xff]
        %v421 = vadd.f32 %v420, %v417
        %422 = vst [vmem:[%s288] sm:$0xff] %v421
        %s423 = sand.u32 %s167, 1
        %s424 = scalar_lea.sflag [#allocation7], %s423
        %s425 = sand.u32 %s167, 1
        %s426 = smul.addr %s425, 8
        %s427 = scalar_lea.vmem [#allocation10], %s426
        // Predicated region
        $region53: #{tpu_custom_call.1} parent=39 // pred_check
          %p428 = pneg %p177
        $region54: #{tpu_custom_call.1} parent=39 // pred_check_branch
          %430 = sbr.rel (%p428) target = $region56
        $region55: #{tpu_custom_call.1} parent=39 // pred_region
          %s432 = ssub.s32 128, 128
          %433 = vsyncadd %s424, %s432
          %s434 = sadd.s32 %s30, %s29
          %s435 = smul.addr %s434, 128
          %s436 = scalar_lea.hbm %s5, %s435
          %s438 = sshll.u32 %s427, 4
          %s439 = int_to_ptr.vmem [resolvable:$true] %s438
          %441 = dma.vmem_to_hbm [thread:$0]  %s439, 128, %s436, %s424
        $region56: #{tpu_custom_call.1} parent=39 // pred_fallthru
          _
      $region40: #{tpu_custom_call.1} parent=5 // pred_fallthru
        _
      %p442 = scmp.le.s32.totalorder 2, %s20
      // Predicated region
      $region57: #{tpu_custom_call.1} parent=5 // pred_check
        %p443 = pneg %p442
      $region58: #{tpu_custom_call.1} parent=5 // pred_check_branch
        %445 = sbr.rel (%p443) target = $region60
      $region59: #{tpu_custom_call.1} parent=5 // pred_region
        %s446 = ssub.s32 %s20, 2
        // Predicated region
        $region61: #{tpu_custom_call.1} parent=59 // pred_check
          %p447 = pneg %p183
        $region62: #{tpu_custom_call.1} parent=59 // pred_check_branch
          %449 = sbr.rel (%p447) target = $region64
        $region63: #{tpu_custom_call.1} parent=59 // pred_region
          %s450 = sand.u32 %s168, 1
          %s451 = scalar_lea.sflag [#allocation7], %s450
          %s452 = sand.u32 %s168, 1
          %s453 = smul.addr %s452, 8
          %s454 = scalar_lea.vmem [#allocation10], %s453
          %455 = dma.done %s451, 128
        $region64: #{tpu_custom_call.1} parent=59 // pred_fallthru
          _
      $region60: #{tpu_custom_call.1} parent=5 // pred_fallthru
        _
    $region6: #{tpu_custom_call.1} parent=1 // loop_footer
      %s24 = sadd.s32 1, %s20
    $region7: #{tpu_custom_call.1} parent=1 // loop_footer_branch
      %19 = sbr.rel target = $region3
    $region8: #{tpu_custom_call.1} parent=1 // loop_exit
      _
    %456 = vsyncpa [#allocation6], 1
    %s457 = scalar_lea.sflag [#allocation6], 1
    %458 = vsyncpa %s457, 1
    %459 = vsyncpa [#allocation9], 1
    %460 = vsyncpa [#allocation7], 1
    %s461 = scalar_lea.sflag [#allocation7], 1
    %462 = vsyncpa %s461, 1

</llo_original>
